<compile_context>
chip_gen: v6e
topology: v6e:2x2x1
jax: 0.10.0
libtpu: 0.0.40
codegen_flags: <defaults>
</compile_context>

<pallas_src>
import functools

import jax
import jax.numpy as jnp
from jax.experimental import pallas as pl
from jax.experimental.pallas import tpu as pltpu


_LANE = 128


def _round_up(x, m):
    return ((x + m - 1) // m) * m


def _pack_factor(L1):
    """How many batch rows fit in one 128-lane row."""
    if L1 <= _LANE and _LANE % L1 == 0:
        return _LANE // L1
    return 1


def prior_e_kernel(z_ref,
                   w1_ref, b1_ref,
                   w2_ref, b2_ref,
                   w3_ref, b3_ref,
                   w4_ref, b4_ref,
                   out_ref,
                   *, compute_dtype, precision):
    """All four layers fused; intermediates never leave vregs/VMEM.

    Inputs (z, weights) arrive already cast to compute_dtype; biases are f32
    and are added to the f32 MXU accumulator (then ReLU, then cast back to
    compute_dtype for the next matmul -- a no-op when compute_dtype is f32).
    """
    x = z_ref[...]

    h = jnp.dot(x, w1_ref[...], preferred_element_type=jnp.float32,
                precision=precision) + b1_ref[...]
    h = jnp.maximum(h, 0.0).astype(compute_dtype)

    h = jnp.dot(h, w2_ref[...], preferred_element_type=jnp.float32,
                precision=precision) + b2_ref[...]
    h = jnp.maximum(h, 0.0).astype(compute_dtype)

    h = jnp.dot(h, w3_ref[...], preferred_element_type=jnp.float32,
                precision=precision) + b3_ref[...]
    h = jnp.maximum(h, 0.0).astype(compute_dtype)

    out = jnp.dot(h, w4_ref[...], preferred_element_type=jnp.float32,
                  precision=precision) + b4_ref[...]
    out_ref[...] = out.astype(out_ref.dtype)


def pack_params(params, compute_dtype=jnp.float32):
    """One-time packing of PriorE params for the kernel.

    * Weights [in, out] become block-diagonal [pack*in, pack*out] (pack copies
      of W on the diagonal) and are cast to compute_dtype (bf16 for deployment,
      f32 for exactness).
    * Biases become [1, pack*out] and stay f32 (added to the f32 accumulator).
    """
    L1 = params["w1"].shape[0]
    L2 = params["w4"].shape[1]
    pack = _pack_factor(L1)
    eye = jnp.eye(pack, dtype=jnp.float32)

    def bd(w):   # block-diagonal replication
        return jnp.kron(eye, w.astype(jnp.float32)).astype(compute_dtype)

    def tb(b):   # tiled bias, kept f32
        return jnp.tile(b.astype(jnp.float32), (1, pack))

    return dict(
        pack=pack, L1=L1, L2=L2,
        w1=bd(params["w1"]), b1=tb(params["b1"]),
        w2=bd(params["w2"]), b2=tb(params["b2"]),
        w3=bd(params["w3"]), b3=tb(params["b3"]),
        w4=bd(params["w4"]), b4=tb(params["b4"]),
    )


def prior_e_forward(z, packed, *, block_rows=8192, precision=None):
    """z: [N, L1]; packed: output of pack_params.

    block_rows: max original batch rows per grid step.
    precision: pass jax.lax.Precision.HIGHEST for true fp32 matmuls (costs
    extra MXU passes); default matches the reference's default precision.
    """
    N, L1 = z.shape
    pack = packed["pack"]
    L2 = packed["L2"]
    assert L1 == packed["L1"]
    compute_dtype = packed["w1"].dtype

    # --- pack `pack` consecutive batch rows into one lane-dense row ---------
    Nr = _round_up(N, pack)                 # only pads by at most pack-1 rows
    zc = z.astype(compute_dtype)
    if Nr != N:
        zc = jnp.pad(zc, ((0, Nr - N), (0, 0)))
    Np = Nr // pack                         # packed rows
    Lz = pack * L1                          # packed input lanes  (128)
    Lo = pack * L2                          # packed output lanes (64)
    zp = zc.reshape(Np, Lz)

    # --- row tile (in packed rows) ------------------------------------------
    tm = max(1, block_rows // pack)
    TM = min(Np, max(8, (tm // 8) * 8))     # multiple of 8, or full extent
    min_steps = 8
    if Np >= min_steps * 8 and pl.cdiv(Np, TM) < min_steps:
        # Keep enough grid steps for pipelining / megacore when N is large.
        TM = min(TM, _round_up(pl.cdiv(Np, min_steps), 8))
    grid = (pl.cdiv(Np, TM),)               # ragged last block handled by
                                            # Pallas boundary-block masking

    row_map = lambda i: (i, 0)              # z / out tiles march over rows
    const_map = lambda i: (0, 0)            # weights stay VMEM-resident

    kernel = functools.partial(prior_e_kernel,
                               compute_dtype=compute_dtype,
                               precision=precision)

    out = pl.pallas_call(
        kernel,
        out_shape=jax.ShapeDtypeStruct((Np, Lo), z.dtype),
        grid=grid,
        in_specs=[
            pl.BlockSpec((TM, Lz), row_map),
            pl.BlockSpec((Lz, Lz), const_map), pl.BlockSpec((1, Lz), const_map),
            pl.BlockSpec((Lz, Lz), const_map), pl.BlockSpec((1, Lz), const_map),
            pl.BlockSpec((Lz, Lz), const_map), pl.BlockSpec((1, Lz), const_map),
            pl.BlockSpec((Lz, Lo), const_map), pl.BlockSpec((1, Lo), const_map),
        ],
        out_specs=pl.BlockSpec((TM, Lo), row_map),
        compiler_params=pltpu.CompilerParams(
            dimension_semantics=("parallel",),
        ),
    )(zp,
      packed["w1"], packed["b1"],
      packed["w2"], packed["b2"],
      packed["w3"], packed["b3"],
      packed["w4"], packed["b4"])

    # Unpack: [Np, pack*L2] -> [Nr, L2]; drop the (at most pack-1) pad rows.
    out = out.reshape(Nr, L2)
    if Nr != N:
        out = out[:N]
    return out


def init_params(key, L1, L2, dtype=jnp.float32):
    """Deterministic synthetic init (PyTorch-like uniform(-1/sqrt(fan_in), +))."""
    keys = jax.random.split(key, 8)

    def lin(kw, kb, fan_in, fan_out):
        bound = 1.0 / jnp.sqrt(fan_in)
        w = jax.random.uniform(kw, (fan_in, fan_out), dtype, -bound, bound)
        b = jax.random.uniform(kb, (1, fan_out), dtype, -bound, bound)
        return w, b

    w1, b1 = lin(keys[0], keys[1], L1, L1)
    w2, b2 = lin(keys[2], keys[3], L1, L1)
    w3, b3 = lin(keys[4], keys[5], L1, L1)
    w4, b4 = lin(keys[6], keys[7], L1, L2)
    return dict(w1=w1, b1=b1, w2=w2, b2=b2, w3=w3, b3=b3, w4=w4, b4=b4)


def prior_e_reference(z, p):
    h = jax.nn.relu(z @ p["w1"] + p["b1"])
    h = jax.nn.relu(h @ p["w2"] + p["b2"])
    h = jax.nn.relu(h @ p["w3"] + p["b3"])
    return h @ p["w4"] + p["b4"]


if __name__ == "__main__":
    key = jax.random.PRNGKey(0)
    # Small shapes consistent with the module: batch=8, latent L1=32, output L2=16.
    N, L1, L2 = 8, 32, 16

    k_z, k_p = jax.random.split(key)
    z = jax.random.normal(k_z, (N, L1), jnp.float32)
    params = init_params(k_p, L1, L2)
    packed = pack_params(params)            # one-time weight packing (f32 path)

    out = jax.block_until_ready(prior_e_forward(z, packed))
    ref = prior_e_reference(z, params)
    assert out.shape == (N, L2)
    assert jnp.allclose(out, ref, atol=1e-5, rtol=1e-5)

    # Also exercise the multi-step / ragged-boundary path (N not a multiple of
    # the row tile; no wrapper pad -- relies on Pallas boundary masking).
    N2 = 1000
    z2 = jax.random.normal(jax.random.PRNGKey(1), (N2, L1), jnp.float32)
    out2 = jax.block_until_ready(prior_e_forward(z2, packed, block_rows=256))
    ref2 = prior_e_reference(z2, params)
    assert out2.shape == (N2, L2)
    assert jnp.allclose(out2, ref2, atol=1e-5, rtol=1e-5)

    print("KERNEL_OK")
</pallas_src>

<mosaic_0001>
module attributes {stable_mosaic.version = 11 : i64} {
  func.func @prior_e_kernel(%arg0: i32, %arg1: memref<2x128xf32, #tpu.memory_space<vmem>>, %arg2: memref<128x128xf32, #tpu.memory_space<vmem>>, %arg3: memref<1x128xf32, #tpu.memory_space<vmem>>, %arg4: memref<128x128xf32, #tpu.memory_space<vmem>>, %arg5: memref<1x128xf32, #tpu.memory_space<vmem>>, %arg6: memref<128x128xf32, #tpu.memory_space<vmem>>, %arg7: memref<1x128xf32, #tpu.memory_space<vmem>>, %arg8: memref<128x64xf32, #tpu.memory_space<vmem>>, %arg9: memref<1x64xf32, #tpu.memory_space<vmem>>, %arg10: memref<2x64xf32, #tpu.memory_space<vmem>>) attributes {dimension_semantics = [#tpu.dimension_semantics<parallel>], iteration_bounds = array<i64: 1>, scalar_prefetch = 0 : i64, scratch_operands = 0 : i64, tpu.core_type = #tpu.core_type<tc>, window_params = [{transform_indices = @transform_0, window_bounds = array<i64: 2, 128>}, {pipeline_mode = #tpu.pipeline_mode<synchronous>, transform_indices = @transform_1, window_bounds = array<i64: 128, 128>}, {pipeline_mode = #tpu.pipeline_mode<synchronous>, transform_indices = @transform_2, window_bounds = array<i64: 1, 128>}, {pipeline_mode = #tpu.pipeline_mode<synchronous>, transform_indices = @transform_3, window_bounds = array<i64: 128, 128>}, {pipeline_mode = #tpu.pipeline_mode<synchronous>, transform_indices = @transform_4, window_bounds = array<i64: 1, 128>}, {pipeline_mode = #tpu.pipeline_mode<synchronous>, transform_indices = @transform_5, window_bounds = array<i64: 128, 128>}, {pipeline_mode = #tpu.pipeline_mode<synchronous>, transform_indices = @transform_6, window_bounds = array<i64: 1, 128>}, {pipeline_mode = #tpu.pipeline_mode<synchronous>, transform_indices = @transform_7, window_bounds = array<i64: 128, 64>}, {pipeline_mode = #tpu.pipeline_mode<synchronous>, transform_indices = @transform_8, window_bounds = array<i64: 1, 64>}, {transform_indices = @transform_9, window_bounds = array<i64: 2, 64>}]} {
    %c0 = arith.constant 0 : index
    %c0_0 = arith.constant 0 : index
    %0 = vector.load %arg1[%c0, %c0_0] : memref<2x128xf32, #tpu.memory_space<vmem>>, vector<2x128xf32>
    %c0_1 = arith.constant 0 : index
    %c0_2 = arith.constant 0 : index
    %1 = vector.load %arg2[%c0_1, %c0_2] : memref<128x128xf32, #tpu.memory_space<vmem>>, vector<128x128xf32>
    %cst = arith.constant dense<0.000000e+00> : vector<2x128xf32>
    %2 = tpu.matmul %0, %1, %cst {dimension_numbers = #tpu.dot_dimension_numbers<[1], [0], [0], [1], [0, 0, 1, 1], [], []>} : vector<2x128xf32>, vector<128x128xf32>, vector<2x128xf32> -> vector<2x128xf32>
    %c0_3 = arith.constant 0 : index
    %c0_4 = arith.constant 0 : index
    %3 = vector.load %arg3[%c0_3, %c0_4] : memref<1x128xf32, #tpu.memory_space<vmem>>, vector<1x128xf32>
    %4 = vector.broadcast %3 : vector<1x128xf32> to vector<2x128xf32>
    %5 = arith.addf %2, %4 : vector<2x128xf32>
    %cst_5 = arith.constant 0.000000e+00 : f32
    %6 = vector.broadcast %cst_5 : f32 to vector<2x128xf32>
    %7 = arith.maximumf %5, %6 : vector<2x128xf32>
    %c0_6 = arith.constant 0 : index
    %c0_7 = arith.constant 0 : index
    %8 = vector.load %arg4[%c0_6, %c0_7] : memref<128x128xf32, #tpu.memory_space<vmem>>, vector<128x128xf32>
    %cst_8 = arith.constant dense<0.000000e+00> : vector<2x128xf32>
    %9 = tpu.matmul %7, %8, %cst_8 {dimension_numbers = #tpu.dot_dimension_numbers<[1], [0], [0], [1], [0, 0, 1, 1], [], []>} : vector<2x128xf32>, vector<128x128xf32>, vector<2x128xf32> -> vector<2x128xf32>
    %c0_9 = arith.constant 0 : index
    %c0_10 = arith.constant 0 : index
    %10 = vector.load %arg5[%c0_9, %c0_10] : memref<1x128xf32, #tpu.memory_space<vmem>>, vector<1x128xf32>
    %11 = vector.broadcast %10 : vector<1x128xf32> to vector<2x128xf32>
    %12 = arith.addf %9, %11 : vector<2x128xf32>
    %cst_11 = arith.constant 0.000000e+00 : f32
    %13 = vector.broadcast %cst_11 : f32 to vector<2x128xf32>
    %14 = arith.maximumf %12, %13 : vector<2x128xf32>
    %c0_12 = arith.constant 0 : index
    %c0_13 = arith.constant 0 : index
    %15 = vector.load %arg6[%c0_12, %c0_13] : memref<128x128xf32, #tpu.memory_space<vmem>>, vector<128x128xf32>
    %cst_14 = arith.constant dense<0.000000e+00> : vector<2x128xf32>
    %16 = tpu.matmul %14, %15, %cst_14 {dimension_numbers = #tpu.dot_dimension_numbers<[1], [0], [0], [1], [0, 0, 1, 1], [], []>} : vector<2x128xf32>, vector<128x128xf32>, vector<2x128xf32> -> vector<2x128xf32>
    %c0_15 = arith.constant 0 : index
    %c0_16 = arith.constant 0 : index
    %17 = vector.load %arg7[%c0_15, %c0_16] : memref<1x128xf32, #tpu.memory_space<vmem>>, vector<1x128xf32>
    %18 = vector.broadcast %17 : vector<1x128xf32> to vector<2x128xf32>
    %19 = arith.addf %16, %18 : vector<2x128xf32>
    %cst_17 = arith.constant 0.000000e+00 : f32
    %20 = vector.broadcast %cst_17 : f32 to vector<2x128xf32>
    %21 = arith.maximumf %19, %20 : vector<2x128xf32>
    %c0_18 = arith.constant 0 : index
    %c0_19 = arith.constant 0 : index
    %22 = vector.load %arg8[%c0_18, %c0_19] : memref<128x64xf32, #tpu.memory_space<vmem>>, vector<128x64xf32>
    %cst_20 = arith.constant dense<0.000000e+00> : vector<2x64xf32>
    %23 = tpu.matmul %21, %22, %cst_20 {dimension_numbers = #tpu.dot_dimension_numbers<[1], [0], [0], [1], [0, 0, 1, 1], [], []>} : vector<2x128xf32>, vector<128x64xf32>, vector<2x64xf32> -> vector<2x64xf32>
    %c0_21 = arith.constant 0 : index
    %c0_22 = arith.constant 0 : index
    %24 = vector.load %arg9[%c0_21, %c0_22] : memref<1x64xf32, #tpu.memory_space<vmem>>, vector<1x64xf32>
    %25 = vector.broadcast %24 : vector<1x64xf32> to vector<2x64xf32>
    %26 = arith.addf %23, %25 : vector<2x64xf32>
    %c0_23 = arith.constant 0 : index
    %c0_24 = arith.constant 0 : index
    %27 = vector.load %arg10[%c0_23, %c0_24] : memref<2x64xf32, #tpu.memory_space<vmem>>, vector<2x64xf32>
    tpu.vector_store %arg10[%c0_23, %c0_24], %26 {strides = array<i32>} : memref<2x64xf32, #tpu.memory_space<vmem>>, vector<2x64xf32>,
    return
  }
  func.func @transform_0(%arg0: i32) -> (i32, i32) {
    %c0_i32 = arith.constant 0 : i32
    %c0_i32_0 = arith.constant 0 : i32
    return %arg0, %c0_i32 : i32, i32
  }
  func.func @transform_1(%arg0: i32) -> (i32, i32) {
    %c0_i32 = arith.constant 0 : i32
    %c0_i32_0 = arith.constant 0 : i32
    %c0_i32_1 = arith.constant 0 : i32
    return %c0_i32, %c0_i32_0 : i32, i32
  }
  func.func @transform_2(%arg0: i32) -> (i32, i32) {
    %c0_i32 = arith.constant 0 : i32
    %c0_i32_0 = arith.constant 0 : i32
    %c0_i32_1 = arith.constant 0 : i32
    return %c0_i32, %c0_i32_0 : i32, i32
  }
  func.func @transform_3(%arg0: i32) -> (i32, i32) {
    %c0_i32 = arith.constant 0 : i32
    %c0_i32_0 = arith.constant 0 : i32
    %c0_i32_1 = arith.constant 0 : i32
    return %c0_i32, %c0_i32_0 : i32, i32
  }
  func.func @transform_4(%arg0: i32) -> (i32, i32) {
    %c0_i32 = arith.constant 0 : i32
    %c0_i32_0 = arith.constant 0 : i32
    %c0_i32_1 = arith.constant 0 : i32
    return %c0_i32, %c0_i32_0 : i32, i32
  }
  func.func @transform_5(%arg0: i32) -> (i32, i32) {
    %c0_i32 = arith.constant 0 : i32
    %c0_i32_0 = arith.constant 0 : i32
    %c0_i32_1 = arith.constant 0 : i32
    return %c0_i32, %c0_i32_0 : i32, i32
  }
  func.func @transform_6(%arg0: i32) -> (i32, i32) {
    %c0_i32 = arith.constant 0 : i32
    %c0_i32_0 = arith.constant 0 : i32
    %c0_i32_1 = arith.constant 0 : i32
    return %c0_i32, %c0_i32_0 : i32, i32
  }
  func.func @transform_7(%arg0: i32) -> (i32, i32) {
    %c0_i32 = arith.constant 0 : i32
    %c0_i32_0 = arith.constant 0 : i32
    %c0_i32_1 = arith.constant 0 : i32
    return %c0_i32, %c0_i32_0 : i32, i32
  }
  func.func @transform_8(%arg0: i32) -> (i32, i32) {
    %c0_i32 = arith.constant 0 : i32
    %c0_i32_0 = arith.constant 0 : i32
    %c0_i32_1 = arith.constant 0 : i32
    return %c0_i32, %c0_i32_0 : i32, i32
  }
  func.func @transform_9(%arg0: i32) -> (i32, i32) {
    %c0_i32 = arith.constant 0 : i32
    %c0_i32_0 = arith.constant 0 : i32
    return %arg0, %c0_i32 : i32, i32
  }
}

</mosaic_0001>

<llo_original>
// kernel: tpu_custom_call.1
$region0: #{tpu_custom_call.1}
  #allocation0 [shape = 'u32[]', space=smem, size = 0x4, offset = 0x4, fixed_abs, tag = 'smem constant byte address 0x4 - core index']
  #allocation1 [shape = 'u32[144,128]{1,0:T(1,128)}', space=vmem, size = 0x12000, scoped, tag = 'internal scratch']
  %s0 = inlined_call_operand.vmem [shape: f32[2,128], index: 0, kind: input, shape index: {}]
  %s1 = inlined_call_operand.vmem [shape: f32[128,128], index: 1, kind: input, shape index: {}]
  %s2 = inlined_call_operand.vmem [shape: f32[1,128], index: 2, kind: input, shape index: {}]
  %s3 = inlined_call_operand.hbm [shape: f32[128,128], index: 3, kind: input, shape index: {}]
  %s4 = inlined_call_operand.vmem [shape: f32[1,128], index: 4, kind: input, shape index: {}]
  %s5 = inlined_call_operand.hbm [shape: f32[128,128], index: 5, kind: input, shape index: {}]
  %s6 = inlined_call_operand.vmem [shape: f32[1,128], index: 6, kind: input, shape index: {}]
  %s7 = inlined_call_operand.vmem [shape: f32[128,64], index: 7, kind: input, shape index: {}]
  %s8 = inlined_call_operand.vmem [shape: f32[1,64], index: 8, kind: input, shape index: {}]
  %s9 = inlined_call_operand.hbm [shape: f32[2,64], index: 9, kind: output, shape index: {}]
  %s10 = sld [smem:[#allocation0]]
  $region54: #{tpu_custom_call.1} parent=0
    _
  %s12 = ssub.s32 1, %s10
  %s13 = scalar_select 0, %s12, %s10
  $region1: #{tpu_custom_call.1} parent=0
    #allocation2 [shape = 'u8[65536]{0}', space=vmem, size = 0x10000, scoped, tag = 'input window, operand 3, single buffered']
    #allocation3 [shape = 's32[1]{0}', space=sflag, size = 0x4, scoped, tag = 'scoped memory for tpu_custom_call.1']
    #allocation4 [shape = 's32[1]{0}', space=sflag, size = 0x4, scoped, tag = 'scoped memory for tpu_custom_call.1']
    #allocation5 [shape = 'u8[65536]{0}', space=vmem, size = 0x10000, scoped, tag = 'input window, operand 5, single buffered']
    #allocation6 [shape = 's32[1]{0}', space=sflag, size = 0x4, scoped, tag = 'scoped memory for tpu_custom_call.1']
    #allocation7 [shape = 'u8[1024]{0}', space=vmem, size = 0x400, scoped, tag = 'output window, operand 0, single buffered']
    %14 = vsyncpa [#allocation3], 0
    %15 = vsyncpa [#allocation6], 0
    %16 = vsyncpa [#allocation4], 0
    // Predicated region
    $region2: #{tpu_custom_call.1} parent=1 // pred_check
      _
    $region3: #{tpu_custom_call.1} parent=1 // pred_check_branch
      %18 = sbr.rel (0) target = $region5
    $region4: #{tpu_custom_call.1} parent=1 // pred_region
      _
    $region5: #{tpu_custom_call.1} parent=1 // pred_fallthru
      _
    // Predicated region
    $region6: #{tpu_custom_call.1} parent=1 // pred_check
      _
    $region7: #{tpu_custom_call.1} parent=1 // pred_check_branch
      %20 = sbr.rel (0) target = $region9
    $region8: #{tpu_custom_call.1} parent=1 // pred_region
      _
    $region9: #{tpu_custom_call.1} parent=1 // pred_fallthru
      _
    // Predicated region
    $region10: #{tpu_custom_call.1} parent=1 // pred_check
      _
    $region11: #{tpu_custom_call.1} parent=1 // pred_check_branch
      %22 = sbr.rel (0) target = $region13
    $region12: #{tpu_custom_call.1} parent=1 // pred_region
      _
    $region13: #{tpu_custom_call.1} parent=1 // pred_fallthru
      _
    // Predicated region
    $region14: #{tpu_custom_call.1} parent=1 // pred_check
      _
    $region15: #{tpu_custom_call.1} parent=1 // pred_check_branch
      %24 = sbr.rel (0) target = $region17
    $region16: #{tpu_custom_call.1} parent=1 // pred_region
      %s26 = ssub.s32 2048, 2048
      %27 = vsyncadd [#allocation3], %s26
      %s28 = sshll.u32 [#allocation2], 4
      %s29 = int_to_ptr.vmem [resolvable:$true] %s28
      %34 = dma.hbm_to_vmem [thread:$0]  %s3, 2048, %s29, [#allocation3], 128, 128, 8
    $region17: #{tpu_custom_call.1} parent=1 // pred_fallthru
      _
    // Predicated region
    $region18: #{tpu_custom_call.1} parent=1 // pred_check
      _
    $region19: #{tpu_custom_call.1} parent=1 // pred_check_branch
      %36 = sbr.rel (0) target = $region21
    $region20: #{tpu_custom_call.1} parent=1 // pred_region
      _
    $region21: #{tpu_custom_call.1} parent=1 // pred_fallthru
      _
    // Predicated region
    $region22: #{tpu_custom_call.1} parent=1 // pred_check
      _
    $region23: #{tpu_custom_call.1} parent=1 // pred_check_branch
      %38 = sbr.rel (0) target = $region25
    $region24: #{tpu_custom_call.1} parent=1 // pred_region
      %s40 = ssub.s32 2048, 2048
      %41 = vsyncadd [#allocation6], %s40
      %s42 = sshll.u32 [#allocation5], 4
      %s43 = int_to_ptr.vmem [resolvable:$true] %s42
      %48 = dma.hbm_to_vmem [thread:$0]  %s5, 2048, %s43, [#allocation6], 128, 128, 8
    $region25: #{tpu_custom_call.1} parent=1 // pred_fallthru
      _
    // Predicated region
    $region26: #{tpu_custom_call.1} parent=1 // pred_check
      _
    $region27: #{tpu_custom_call.1} parent=1 // pred_check_branch
      %50 = sbr.rel (0) target = $region29
    $region28: #{tpu_custom_call.1} parent=1 // pred_region
      _
    $region29: #{tpu_custom_call.1} parent=1 // pred_fallthru
      _
    // Predicated region
    $region30: #{tpu_custom_call.1} parent=1 // pred_check
      _
    $region31: #{tpu_custom_call.1} parent=1 // pred_check_branch
      %52 = sbr.rel (0) target = $region33
    $region32: #{tpu_custom_call.1} parent=1 // pred_region
      _
    $region33: #{tpu_custom_call.1} parent=1 // pred_fallthru
      _
    // Predicated region
    $region34: #{tpu_custom_call.1} parent=1 // pred_check
      _
    $region35: #{tpu_custom_call.1} parent=1 // pred_check_branch
      %54 = sbr.rel (0) target = $region37
    $region36: #{tpu_custom_call.1} parent=1 // pred_region
      _
    $region37: #{tpu_custom_call.1} parent=1 // pred_fallthru
      _
    // Predicated region
    $region38: #{tpu_custom_call.1} parent=1 // pred_check
      _
    $region39: #{tpu_custom_call.1} parent=1 // pred_check_branch
      %56 = sbr.rel (0) target = $region41
    $region40: #{tpu_custom_call.1} parent=1 // pred_region
      %57 = dma.done [#allocation3], 2048
    $region41: #{tpu_custom_call.1} parent=1 // pred_fallthru
      _
    // Predicated region
    $region42: #{tpu_custom_call.1} parent=1 // pred_check
      _
    $region43: #{tpu_custom_call.1} parent=1 // pred_check_branch
      %59 = sbr.rel (0) target = $region45
    $region44: #{tpu_custom_call.1} parent=1 // pred_region
      %60 = dma.done [#allocation6], 2048
    $region45: #{tpu_custom_call.1} parent=1 // pred_fallthru
      _
    %v61 = vld [vmem:[%s0] sm:$0x3]
    %v62 = vld [vmem:[%s1] sm:$0xff]
    %v63 = vld [vmem:[%s1 + $0x8] sm:$0xff]
    %v64 = vld [vmem:[%s1 + $0x10] sm:$0xff]
    %v65 = vld [vmem:[%s1 + $0x18] sm:$0xff]
    %v66 = vld [vmem:[%s1 + $0x20] sm:$0xff]
    %v67 = vld [vmem:[%s1 + $0x28] sm:$0xff]
    %v68 = vld [vmem:[%s1 + $0x30] sm:$0xff]
    %v69 = vld [vmem:[%s1 + $0x38] sm:$0xff]
    %v70 = vld [vmem:[%s1 + $0x40] sm:$0xff]
    %v71 = vld [vmem:[%s1 + $0x48] sm:$0xff]
    %v72 = vld [vmem:[%s1 + $0x50] sm:$0xff]
    %v73 = vld [vmem:[%s1 + $0x58] sm:$0xff]
    %v74 = vld [vmem:[%s1 + $0x60] sm:$0xff]
    %v75 = vld [vmem:[%s1 + $0x68] sm:$0xff]
    %v76 = vld [vmem:[%s1 + $0x70] sm:$0xff]
    %v77 = vld [vmem:[%s1 + $0x78] sm:$0xff]
    %v78 = vld [vmem:[%s2] sm:$0x1]
    %v80 = vlaneseq
    %v81 = vshrl.u32 %v80, 7
    %v82 = vsub.s32 0, %v81
    %v83 = vrot.slane %v78, %v82
    %85 = vmatprep.subr.mxu0 0.0
    %86 = vmatpush1.msra.mxu0 %v77
    %87 = vmatprep.subr.mxu0 0.0
    %88 = vmatpush1.msra.mxu0 %v76
    %89 = vmatprep.subr.mxu0 0.0
    %90 = vmatpush1.msra.mxu0 %v75
    %91 = vmatprep.subr.mxu0 0.0
    %92 = vmatpush1.msra.mxu0 %v74
    %93 = vmatprep.subr.mxu0 0.0
    %94 = vmatpush1.msra.mxu0 %v73
    %95 = vmatprep.subr.mxu0 0.0
    %96 = vmatpush1.msra.mxu0 %v72
    %97 = vmatprep.subr.mxu0 0.0
    %98 = vmatpush1.msra.mxu0 %v71
    %99 = vmatprep.subr.mxu0 0.0
    %100 = vmatpush1.msra.mxu0 %v70
    %101 = vmatprep.subr.mxu0 0.0
    %102 = vmatpush1.msra.mxu0 %v69
    %103 = vmatprep.subr.mxu0 0.0
    %104 = vmatpush1.msra.mxu0 %v68
    %105 = vmatprep.subr.mxu0 0.0
    %106 = vmatpush1.msra.mxu0 %v67
    %107 = vmatprep.subr.mxu0 0.0
    %108 = vmatpush1.msra.mxu0 %v66
    %109 = vmatprep.subr.mxu0 0.0
    %110 = vmatpush1.msra.mxu0 %v65
    %111 = vmatprep.subr.mxu0 0.0
    %112 = vmatpush1.msra.mxu0 %v64
    %113 = vmatprep.subr.mxu0 0.0
    %114 = vmatpush1.msra.mxu0 %v63
    %115 = vmatprep.subr.mxu0 0.0
    %116 = vmatpush1.msra.mxu0 %v62
    %117 = vmatprep.subr.mxu0 0.0
    %118 = vmatpush2.msra.mxu0 0.0
    %119 = vmatprep.subr.mxu0 0.0
    %120 = vmatpush2.msra.mxu0 0.0
    %121 = vmatprep.subr.mxu0 0.0
    %122 = vmatpush2.msra.mxu0 0.0
    %123 = vmatprep.subr.mxu0 0.0
    %124 = vmatpush2.msra.mxu0 0.0
    %125 = vmatprep.subr.mxu0 0.0
    %126 = vmatpush2.msra.mxu0 0.0
    %127 = vmatprep.subr.mxu0 0.0
    %128 = vmatpush2.msra.mxu0 0.0
    %129 = vmatprep.subr.mxu0 0.0
    %130 = vmatpush2.msra.mxu0 0.0
    %131 = vmatprep.subr.mxu0 0.0
    %132 = vmatpush2.msra.mxu0 0.0
    %133 = vmatprep.subr.mxu0 0.0
    %134 = vmatpush2.msra.mxu0 0.0
    %135 = vmatprep.subr.mxu0 0.0
    %136 = vmatpush2.msra.mxu0 0.0
    %137 = vmatprep.subr.mxu0 0.0
    %138 = vmatpush2.msra.mxu0 0.0
    %139 = vmatprep.subr.mxu0 0.0
    %140 = vmatpush2.msra.mxu0 0.0
    %141 = vmatprep.subr.mxu0 0.0
    %142 = vmatpush2.msra.mxu0 0.0
    %143 = vmatprep.subr.mxu0 0.0
    %144 = vmatpush2.msra.mxu0 0.0
    %145 = vmatprep.subr.mxu0 0.0
    %146 = vmatpush2.msra.mxu0 0.0
    %147 = vmatprep.subr.mxu0 0.0
    %148 = vmatpush2.msra.mxu0 0.0
    %149 = vmatprep.mubr.f32.mxu0 0.0
    %150 = vmatmul.mubr.f32.gmra.mxu0 %v61
    %v151 = vpop.f32.mrf.mxu0
    %v152 = vadd.f32 %v83, %v151
    %v153 = vpop.f32.mrf.mxu0
    %154 = vdwg.mxu0
    %v155 = vmax.f32 %v152, 0.0
    %v156 = vld [vmem:[#allocation2] sm:$0xff]
    %v157 = vld [vmem:[#allocation2 + $0x8] sm:$0xff]
    %v158 = vld [vmem:[#allocation2 + $0x10] sm:$0xff]
    %v159 = vld [vmem:[#allocation2 + $0x18] sm:$0xff]
    %v160 = vld [vmem:[#allocation2 + $0x20] sm:$0xff]
    %v161 = vld [vmem:[#allocation2 + $0x28] sm:$0xff]
    %v162 = vld [vmem:[#allocation2 + $0x30] sm:$0xff]
    %v163 = vld [vmem:[#allocation2 + $0x38] sm:$0xff]
    %v164 = vld [vmem:[#allocation2 + $0x40] sm:$0xff]
    %v165 = vld [vmem:[#allocation2 + $0x48] sm:$0xff]
    %v166 = vld [vmem:[#allocation2 + $0x50] sm:$0xff]
    %v167 = vld [vmem:[#allocation2 + $0x58] sm:$0xff]
    %v168 = vld [vmem:[#allocation2 + $0x60] sm:$0xff]
    %v169 = vld [vmem:[#allocation2 + $0x68] sm:$0xff]
    %v170 = vld [vmem:[#allocation2 + $0x70] sm:$0xff]
    %v171 = vld [vmem:[#allocation2 + $0x78] sm:$0xff]
    %v172 = vld [vmem:[%s4] sm:$0x1]
    %v174 = vlaneseq
    %v175 = vshrl.u32 %v174, 7
    %v176 = vsub.s32 0, %v175
    %v177 = vrot.slane %v172, %v176
    %179 = vmatprep.subr.mxu0 0.0
    %180 = vmatpush1.msra.mxu0 %v171
    %181 = vmatprep.subr.mxu0 0.0
    %182 = vmatpush1.msra.mxu0 %v170
    %183 = vmatprep.subr.mxu0 0.0
    %184 = vmatpush1.msra.mxu0 %v169
    %185 = vmatprep.subr.mxu0 0.0
    %186 = vmatpush1.msra.mxu0 %v168
    %187 = vmatprep.subr.mxu0 0.0
    %188 = vmatpush1.msra.mxu0 %v167
    %189 = vmatprep.subr.mxu0 0.0
    %190 = vmatpush1.msra.mxu0 %v166
    %191 = vmatprep.subr.mxu0 0.0
    %192 = vmatpush1.msra.mxu0 %v165
    %193 = vmatprep.subr.mxu0 0.0
    %194 = vmatpush1.msra.mxu0 %v164
    %195 = vmatprep.subr.mxu0 0.0
    %196 = vmatpush1.msra.mxu0 %v163
    %197 = vmatprep.subr.mxu0 0.0
    %198 = vmatpush1.msra.mxu0 %v162
    %199 = vmatprep.subr.mxu0 0.0
    %200 = vmatpush1.msra.mxu0 %v161
    %201 = vmatprep.subr.mxu0 0.0
    %202 = vmatpush1.msra.mxu0 %v160
    %203 = vmatprep.subr.mxu0 0.0
    %204 = vmatpush1.msra.mxu0 %v159
    %205 = vmatprep.subr.mxu0 0.0
    %206 = vmatpush1.msra.mxu0 %v158
    %207 = vmatprep.subr.mxu0 0.0
    %208 = vmatpush1.msra.mxu0 %v157
    %209 = vmatprep.subr.mxu0 0.0
    %210 = vmatpush1.msra.mxu0 %v156
    %211 = vmatprep.subr.mxu0 0.0
    %212 = vmatpush2.msra.mxu0 0.0
    %213 = vmatprep.subr.mxu0 0.0
    %214 = vmatpush2.msra.mxu0 0.0
    %215 = vmatprep.subr.mxu0 0.0
    %216 = vmatpush2.msra.mxu0 0.0
    %217 = vmatprep.subr.mxu0 0.0
    %218 = vmatpush2.msra.mxu0 0.0
    %219 = vmatprep.subr.mxu0 0.0
    %220 = vmatpush2.msra.mxu0 0.0
    %221 = vmatprep.subr.mxu0 0.0
    %222 = vmatpush2.msra.mxu0 0.0
    %223 = vmatprep.subr.mxu0 0.0
    %224 = vmatpush2.msra.mxu0 0.0
    %225 = vmatprep.subr.mxu0 0.0
    %226 = vmatpush2.msra.mxu0 0.0
    %227 = vmatprep.subr.mxu0 0.0
    %228 = vmatpush2.msra.mxu0 0.0
    %229 = vmatprep.subr.mxu0 0.0
    %230 = vmatpush2.msra.mxu0 0.0
    %231 = vmatprep.subr.mxu0 0.0
    %232 = vmatpush2.msra.mxu0 0.0
    %233 = vmatprep.subr.mxu0 0.0
    %234 = vmatpush2.msra.mxu0 0.0
    %235 = vmatprep.subr.mxu0 0.0
    %236 = vmatpush2.msra.mxu0 0.0
    %237 = vmatprep.subr.mxu0 0.0
    %238 = vmatpush2.msra.mxu0 0.0
    %239 = vmatprep.subr.mxu0 0.0
    %240 = vmatpush2.msra.mxu0 0.0
    %241 = vmatprep.subr.mxu0 0.0
    %242 = vmatpush2.msra.mxu0 0.0
    %243 = vmatprep.mubr.f32.mxu0 0.0
    %244 = vmatmul.mubr.f32.gmra.mxu0 %v155
    %v245 = vpop.f32.mrf.mxu0
    %v246 = vadd.f32 %v177, %v245
    %v247 = vpop.f32.mrf.mxu0
    %248 = vdwg.mxu0
    %v249 = vmax.f32 %v246, 0.0
    %v250 = vld [vmem:[#allocation5] sm:$0xff]
    %v251 = vld [vmem:[#allocation5 + $0x8] sm:$0xff]
    %v252 = vld [vmem:[#allocation5 + $0x10] sm:$0xff]
    %v253 = vld [vmem:[#allocation5 + $0x18] sm:$0xff]
    %v254 = vld [vmem:[#allocation5 + $0x20] sm:$0xff]
    %v255 = vld [vmem:[#allocation5 + $0x28] sm:$0xff]
    %v256 = vld [vmem:[#allocation5 + $0x30] sm:$0xff]
    %v257 = vld [vmem:[#allocation5 + $0x38] sm:$0xff]
    %v258 = vld [vmem:[#allocation5 + $0x40] sm:$0xff]
    %v259 = vld [vmem:[#allocation5 + $0x48] sm:$0xff]
    %v260 = vld [vmem:[#allocation5 + $0x50] sm:$0xff]
    %v261 = vld [vmem:[#allocation5 + $0x58] sm:$0xff]
    %v262 = vld [vmem:[#allocation5 + $0x60] sm:$0xff]
    %v263 = vld [vmem:[#allocation5 + $0x68] sm:$0xff]
    %v264 = vld [vmem:[#allocation5 + $0x70] sm:$0xff]
    %v265 = vld [vmem:[#allocation5 + $0x78] sm:$0xff]
    %v266 = vld [vmem:[%s6] sm:$0x1]
    %v268 = vlaneseq
    %v269 = vshrl.u32 %v268, 7
    %v270 = vsub.s32 0, %v269
    %v271 = vrot.slane %v266, %v270
    %273 = vmatprep.subr.mxu0 0.0
    %274 = vmatpush1.msra.mxu0 %v265
    %275 = vmatprep.subr.mxu0 0.0
    %276 = vmatpush1.msra.mxu0 %v264
    %277 = vmatprep.subr.mxu0 0.0
    %278 = vmatpush1.msra.mxu0 %v263
    %279 = vmatprep.subr.mxu0 0.0
    %280 = vmatpush1.msra.mxu0 %v262
    %281 = vmatprep.subr.mxu0 0.0
    %282 = vmatpush1.msra.mxu0 %v261
    %283 = vmatprep.subr.mxu0 0.0
    %284 = vmatpush1.msra.mxu0 %v260
    %285 = vmatprep.subr.mxu0 0.0
    %286 = vmatpush1.msra.mxu0 %v259
    %287 = vmatprep.subr.mxu0 0.0
    %288 = vmatpush1.msra.mxu0 %v258
    %289 = vmatprep.subr.mxu0 0.0
    %290 = vmatpush1.msra.mxu0 %v257
    %291 = vmatprep.subr.mxu0 0.0
    %292 = vmatpush1.msra.mxu0 %v256
    %293 = vmatprep.subr.mxu0 0.0
    %294 = vmatpush1.msra.mxu0 %v255
    %295 = vmatprep.subr.mxu0 0.0
    %296 = vmatpush1.msra.mxu0 %v254
    %297 = vmatprep.subr.mxu0 0.0
    %298 = vmatpush1.msra.mxu0 %v253
    %299 = vmatprep.subr.mxu0 0.0
    %300 = vmatpush1.msra.mxu0 %v252
    %301 = vmatprep.subr.mxu0 0.0
    %302 = vmatpush1.msra.mxu0 %v251
    %303 = vmatprep.subr.mxu0 0.0
    %304 = vmatpush1.msra.mxu0 %v250
    %305 = vmatprep.subr.mxu0 0.0
    %306 = vmatpush2.msra.mxu0 0.0
    %307 = vmatprep.subr.mxu0 0.0
    %308 = vmatpush2.msra.mxu0 0.0
    %309 = vmatprep.subr.mxu0 0.0
    %310 = vmatpush2.msra.mxu0 0.0
    %311 = vmatprep.subr.mxu0 0.0
    %312 = vmatpush2.msra.mxu0 0.0
    %313 = vmatprep.subr.mxu0 0.0
    %314 = vmatpush2.msra.mxu0 0.0
    %315 = vmatprep.subr.mxu0 0.0
    %316 = vmatpush2.msra.mxu0 0.0
    %317 = vmatprep.subr.mxu0 0.0
    %318 = vmatpush2.msra.mxu0 0.0
    %319 = vmatprep.subr.mxu0 0.0
    %320 = vmatpush2.msra.mxu0 0.0
    %321 = vmatprep.subr.mxu0 0.0
    %322 = vmatpush2.msra.mxu0 0.0
    %323 = vmatprep.subr.mxu0 0.0
    %324 = vmatpush2.msra.mxu0 0.0
    %325 = vmatprep.subr.mxu0 0.0
    %326 = vmatpush2.msra.mxu0 0.0
    %327 = vmatprep.subr.mxu0 0.0
    %328 = vmatpush2.msra.mxu0 0.0
    %329 = vmatprep.subr.mxu0 0.0
    %330 = vmatpush2.msra.mxu0 0.0
    %331 = vmatprep.subr.mxu0 0.0
    %332 = vmatpush2.msra.mxu0 0.0
    %333 = vmatprep.subr.mxu0 0.0
    %334 = vmatpush2.msra.mxu0 0.0
    %335 = vmatprep.subr.mxu0 0.0
    %336 = vmatpush2.msra.mxu0 0.0
    %337 = vmatprep.mubr.f32.mxu0 0.0
    %338 = vmatmul.mubr.f32.gmra.mxu0 %v249
    %v339 = vpop.f32.mrf.mxu0
    %v340 = vadd.f32 %v271, %v339
    %v341 = vpop.f32.mrf.mxu0
    %342 = vdwg.mxu0
    %v343 = vmax.f32 %v340, 0.0
    %v344 = vld [vmem:[%s7] sm:$0xff]
    %v345 = vld [vmem:[%s7 + $0x8] sm:$0xff]
    %v346 = vld [vmem:[%s7 + $0x10] sm:$0xff]
    %v347 = vld [vmem:[%s7 + $0x18] sm:$0xff]
    %v348 = vld [vmem:[%s7 + $0x20] sm:$0xff]
    %v349 = vld [vmem:[%s7 + $0x28] sm:$0xff]
    %v350 = vld [vmem:[%s7 + $0x30] sm:$0xff]
    %v351 = vld [vmem:[%s7 + $0x38] sm:$0xff]
    %v352 = vld [vmem:[%s7 + $0x40] sm:$0xff]
    %v353 = vld [vmem:[%s7 + $0x48] sm:$0xff]
    %v354 = vld [vmem:[%s7 + $0x50] sm:$0xff]
    %v355 = vld [vmem:[%s7 + $0x58] sm:$0xff]
    %v356 = vld [vmem:[%s7 + $0x60] sm:$0xff]
    %v357 = vld [vmem:[%s7 + $0x68] sm:$0xff]
    %v358 = vld [vmem:[%s7 + $0x70] sm:$0xff]
    %v359 = vld [vmem:[%s7 + $0x78] sm:$0xff]
    %v360 = vld [vmem:[%s8] sm:$0x1]
    %v362 = vlaneseq
    %v363 = vshrl.u32 %v362, 7
    %v364 = vsub.s32 0, %v363
    %v365 = vrot.slane %v360, %v364
    %367 = vmatprep.subr.mxu0 0.0
    %368 = vmatpush1.msra.mxu0 %v359
    %369 = vmatprep.subr.mxu0 0.0
    %370 = vmatpush1.msra.mxu0 %v358
    %371 = vmatprep.subr.mxu0 0.0
    %372 = vmatpush1.msra.mxu0 %v357
    %373 = vmatprep.subr.mxu0 0.0
    %374 = vmatpush1.msra.mxu0 %v356
    %375 = vmatprep.subr.mxu0 0.0
    %376 = vmatpush1.msra.mxu0 %v355
    %377 = vmatprep.subr.mxu0 0.0
    %378 = vmatpush1.msra.mxu0 %v354
    %379 = vmatprep.subr.mxu0 0.0
    %380 = vmatpush1.msra.mxu0 %v353
    %381 = vmatprep.subr.mxu0 0.0
    %382 = vmatpush1.msra.mxu0 %v352
    %383 = vmatprep.subr.mxu0 0.0
    %384 = vmatpush1.msra.mxu0 %v351
    %385 = vmatprep.subr.mxu0 0.0
    %386 = vmatpush1.msra.mxu0 %v350
    %387 = vmatprep.subr.mxu0 0.0
    %388 = vmatpush1.msra.mxu0 %v349
    %389 = vmatprep.subr.mxu0 0.0
    %390 = vmatpush1.msra.mxu0 %v348
    %391 = vmatprep.subr.mxu0 0.0
    %392 = vmatpush1.msra.mxu0 %v347
    %393 = vmatprep.subr.mxu0 0.0
    %394 = vmatpush1.msra.mxu0 %v346
    %395 = vmatprep.subr.mxu0 0.0
    %396 = vmatpush1.msra.mxu0 %v345
    %397 = vmatprep.subr.mxu0 0.0
    %398 = vmatpush1.msra.mxu0 %v344
    %399 = vmatprep.subr.mxu0 0.0
    %400 = vmatpush2.msra.mxu0 0.0
    %401 = vmatprep.subr.mxu0 0.0
    %402 = vmatpush2.msra.mxu0 0.0
    %403 = vmatprep.subr.mxu0 0.0
    %404 = vmatpush2.msra.mxu0 0.0
    %405 = vmatprep.subr.mxu0 0.0
    %406 = vmatpush2.msra.mxu0 0.0
    %407 = vmatprep.subr.mxu0 0.0
    %408 = vmatpush2.msra.mxu0 0.0
    %409 = vmatprep.subr.mxu0 0.0
    %410 = vmatpush2.msra.mxu0 0.0
    %411 = vmatprep.subr.mxu0 0.0
    %412 = vmatpush2.msra.mxu0 0.0
    %413 = vmatprep.subr.mxu0 0.0
    %414 = vmatpush2.msra.mxu0 0.0
    %415 = vmatprep.subr.mxu0 0.0
    %416 = vmatpush2.msra.mxu0 0.0
    %417 = vmatprep.subr.mxu0 0.0
    %418 = vmatpush2.msra.mxu0 0.0
    %419 = vmatprep.subr.mxu0 0.0
    %420 = vmatpush2.msra.mxu0 0.0
    %421 = vmatprep.subr.mxu0 0.0
    %422 = vmatpush2.msra.mxu0 0.0
    %423 = vmatprep.subr.mxu0 0.0
    %424 = vmatpush2.msra.mxu0 0.0
    %425 = vmatprep.subr.mxu0 0.0
    %426 = vmatpush2.msra.mxu0 0.0
    %427 = vmatprep.subr.mxu0 0.0
    %428 = vmatpush2.msra.mxu0 0.0
    %429 = vmatprep.subr.mxu0 0.0
    %430 = vmatpush2.msra.mxu0 0.0
    %431 = vmatprep.mubr.f32.mxu0 0.0
    %432 = vmatmul.mubr.f32.gmra.mxu0 %v343
    %v433 = vpop.f32.mrf.mxu0
    %v434 = vadd.f32 %v365, %v433
    %v435 = vpop.f32.mrf.mxu0
    %436 = vdwg.mxu0
    %vm437 = vcmask 517120
    %438 = vst.msk [vmem:[#allocation7] sm:$0x3] %vm437, %v434
    // Predicated region
    $region46: #{tpu_custom_call.1} parent=1 // pred_check
      _
    $region47: #{tpu_custom_call.1} parent=1 // pred_check_branch
      %440 = sbr.rel (0) target = $region49
    $region48: #{tpu_custom_call.1} parent=1 // pred_region
      %s442 = ssub.s32 32, 32
      %443 = vsyncadd [#allocation4], %s442
      %s445 = sshll.u32 [#allocation7], 4
      %s446 = int_to_ptr.vmem [resolvable:$true] %s445
      %448 = dma.vmem_to_hbm [thread:$0]  %s446, 32, %s9, [#allocation4]
    $region49: #{tpu_custom_call.1} parent=1 // pred_fallthru
      _
    // Predicated region
    $region50: #{tpu_custom_call.1} parent=1 // pred_check
      _
    $region51: #{tpu_custom_call.1} parent=1 // pred_check_branch
      %450 = sbr.rel (0) target = $region53
    $region52: #{tpu_custom_call.1} parent=1 // pred_region
      %451 = dma.done [#allocation4], 32
    $region53: #{tpu_custom_call.1} parent=1 // pred_fallthru
      _
    %452 = vsyncpa [#allocation3], 1
    %453 = vsyncpa [#allocation6], 1
    %454 = vsyncpa [#allocation4], 1

</llo_original>
